<compile_context>
chip_gen: v6e
topology: v6e:2x2x1
jax: 0.10.0
libtpu: 0.0.40
codegen_flags: <defaults>
</compile_context>

<pallas_src>
import functools
import math

import jax
import jax.numpy as jnp
import numpy as np
from jax.experimental import pallas as pl
from jax.experimental.pallas import tpu as pltpu

# ----------------------------------------------------------------------------
# Static synth configuration ("__init__" of FMSynth, resolved at trace time)
# ----------------------------------------------------------------------------
SAMPLE_RATE = 16000.0
RATIOS = (1.0, 2.0)                 # per-operator tuning ratio vs. fundamental
OPERATOR_GAINS = (1.0, 0.7)         # per-operator gain
EG_PARAMS = ((0.005, 0.25),         # (attack, decay) for operator 0's envelope
             (0.002, 0.10))         # (attack, decay) for operator 1's envelope
OPERATOR_ROUTING = ((1, 0),)        # (modulator, carrier) pairs
NUM_OPERATORS = 2


def _build_routing(num_ops, routing):
    """Mirror of FMSynth.__init__ routing resolution."""
    mod_sources = [[] for _ in range(num_ops)]
    for r in routing:
        mod_sources[r[1]].append(r[0])
    terminal = []
    for i in range(num_ops):
        is_terminal = True
        for j in range(num_ops):
            if i == j:
                continue
            if i in mod_sources[j]:
                is_terminal = False
                break
        if is_terminal:
            terminal.append(i)
    return mod_sources, terminal


MOD_SOURCES, TERMINAL_OPS = _build_routing(NUM_OPERATORS, OPERATOR_ROUTING)
TWO_PI = 2.0 * math.pi
INV_SR = 1.0 / SAMPLE_RATE


# ----------------------------------------------------------------------------
# Pallas kernel: one [B_TILE, T_TILE] tile; running cumsums carried in scratch
# ----------------------------------------------------------------------------
def fm_synth_kernel(gate_ref, freq_ref, tri_ref, trow_ref, out_ref,
                    gate_carry, freq_carry, *, const_freq):
    t_step = pl.program_id(1)

    # New batch block starts a fresh time sweep: reset the running sums.
    @pl.when(t_step == 0)
    def _():
        gate_carry[...] = jnp.zeros_like(gate_carry)
        freq_carry[...] = jnp.zeros_like(freq_carry)

    gate = gate_ref[...]                     # [Bt, Tt] f32 (0/1 values)
    tri = tri_ref[...]                       # [Tt, Tt] bf16 upper-tri ones

    # Gate cumsum: 0/1 data is exact in bf16 -> single-pass bf16 MXU dot with
    # f32 accumulation; add the carry from previous time tiles.
    gate_cum = (jnp.dot(gate.astype(jnp.bfloat16), tri,
                        preferred_element_type=jnp.float32)
                + gate_carry[...])
    gate_carry[...] = gate_cum[:, -1:]       # running sum for the next tile

    if const_freq:
        # Frequency constant over time: inclusive cumsum is f0 * (t+1).
        # trow_ref holds the precomputed resident (t+1)/sample_rate row, so
        # this is a single broadcast multiply (no matmul, no per-step iota).
        base_cycles = freq_ref[...] * trow_ref[...]     # [Bt,1] * [1,Tt]
    else:
        # Time-varying frequency: hi/lo bf16 split keeps ~16 mantissa bits of
        # the input while staying on the single-pass bf16 MXU path (an f32 dot
        # would cost 3-6x and silently drop to bf16 at default precision).
        freq = freq_ref[...]                 # [Bt, Tt] f32
        f_hi = freq.astype(jnp.bfloat16)
        f_lo = (freq - f_hi.astype(jnp.float32)).astype(jnp.bfloat16)
        freq_cum = (jnp.dot(f_hi, tri, preferred_element_type=jnp.float32)
                    + jnp.dot(f_lo, tri, preferred_element_type=jnp.float32)
                    + freq_carry[...])
        freq_carry[...] = freq_cum[:, -1:]
        base_cycles = freq_cum * INV_SR      # cycles of the fundamental

    # Envelope generators:  eg(gate, attack, decay, sample_rate)
    t_on = gate_cum * INV_SR                 # time spent gated-on (seconds)
    envelopes = []
    for (attack, decay) in EG_PARAMS:
        env = (1.0 - jnp.exp(t_on * (-1.0 / attack))) * jnp.exp(t_on * (-1.0 / decay))
        envelopes.append(env)
    # TODO(synk): bf16 sin/exp on v6e/v7x (bf16 EUP) once tolerance allows.

    # Recursive operator rendering with memoisation (resolved at trace time),
    # mirroring FMSynth.forward's render_operator.  Cumsum linearity:
    # cumsum(freq * ratio) == cumsum(freq) * ratio, so every operator shares
    # base_cycles and applies a cheap VALU scale; the whole-cycle count is
    # range-reduced before going to radians so the f32 sin argument stays small.
    operator_outputs = [None] * NUM_OPERATORS

    def render_operator(n):
        if operator_outputs[n] is None:
            mods = [render_operator(m) for m in MOD_SOURCES[n]]
            cycles = base_cycles * RATIOS[n]
            cycles = cycles - jnp.floor(cycles)          # mod 1 cycle
            phase = cycles * TWO_PI
            for m in mods:
                phase = phase + m
            operator_outputs[n] = jnp.sin(phase) * envelopes[n] * OPERATOR_GAINS[n]
        return operator_outputs[n]

    out = render_operator(TERMINAL_OPS[0])
    for t_op in TERMINAL_OPS[1:]:
        out = out + render_operator(t_op)
    out_ref[...] = out.astype(out_ref.dtype)


# ----------------------------------------------------------------------------
# Tile-size heuristics
# ----------------------------------------------------------------------------
def _pick_b_tile(B):
    """Large sublane tiles (amortize the resident RHS + per-step overhead),
    but keep >= 2 batch blocks when cleanly possible so both v7x TCs get work."""
    cap = 256
    if B <= cap:
        half = B // 2
        if B % 2 == 0 and half % 8 == 0:
            return half                      # two batch blocks -> megacore
        return B                             # full-extent block is always legal
    for t in range(cap, 7, -1):
        if B % t == 0 and t % 8 == 0:
            return t
    return B                                 # fall back to one full-batch block


def _pick_t_tile(T):
    """Time-tile for the blocked cumsum; O(T_TILE^2) triangular block."""
    if T <= 1024:
        return T
    for t in (1024, 512, 256, 128):
        if T % t == 0:
            return t
    # TODO(synk): pad odd buffer lengths to a multiple of 128 instead of
    # falling back to a monolithic T x T triangular matrix.
    return T


# ----------------------------------------------------------------------------
# Wrapper (glue): dtype handling, resident constants, 2-D grid
# ----------------------------------------------------------------------------
def fm_synth_forward(gate, frequency, *, b_tile=None, t_tile=None):
    B, T = gate.shape
    gate = gate.astype(jnp.float32)
    const_freq = frequency.shape[-1] == 1
    frequency = frequency.astype(jnp.float32)
    if not const_freq and frequency.shape != (B, T):
        frequency = jnp.broadcast_to(frequency, (B, T))

    if b_tile is None:
        b_tile = _pick_b_tile(B)
    if B % b_tile != 0:
        b_tile = B
    if t_tile is None:
        t_tile = _pick_t_tile(T)
    if T % t_tile != 0:
        t_tile = T

    grid = (B // b_tile, T // t_tile)

    # Upper-triangular ones block (row <= col), bf16 (exact for 0/1 data),
    # built once on the host; constant index_map + Buffered(1) -> exactly one
    # resident copy in VMEM, DMA'd once.
    tri = jnp.triu(jnp.ones((t_tile, t_tile), jnp.bfloat16))
    # Resident (t+1)/sample_rate row for the constant-frequency closed form.
    trow = ((jnp.arange(T, dtype=jnp.float32) + 1.0) * INV_SR)[None, :]

    freq_block = (b_tile, 1) if const_freq else (b_tile, t_tile)
    freq_index = (lambda b, t: (b, 0)) if const_freq else (lambda b, t: (b, t))

    # Scoped-VMEM budget: single-buffered triangular block + double-buffered
    # gate/freq/out/trow tiles + carries + headroom for compute temporaries.
    tri_bytes = t_tile * t_tile * 2
    tile_bytes = b_tile * t_tile * 4
    freq_bytes = (b_tile * 4) if const_freq else tile_bytes
    est = (tri_bytes
           + 2 * (tile_bytes + freq_bytes + tile_bytes + t_tile * 4)
           + 2 * b_tile * 128 * 4
           + 12 * tile_bytes)                # envelopes / phases / hi-lo temps
    vmem_limit = int(min(60 * 1024 * 1024, max(24 * 1024 * 1024, est)))

    kernel = functools.partial(fm_synth_kernel, const_freq=const_freq)

    return pl.pallas_call(
        kernel,
        out_shape=jax.ShapeDtypeStruct((B, T), jnp.float32),
        grid=grid,
        in_specs=[
            pl.BlockSpec((b_tile, t_tile), lambda b, t: (b, t)),    # gate
            pl.BlockSpec(freq_block, freq_index),                   # frequency
            pl.BlockSpec((t_tile, t_tile), lambda b, t: (0, 0),     # triangular
                         pipeline_mode=pl.Buffered(1)),
            pl.BlockSpec((1, t_tile), lambda b, t: (0, t)),         # (t+1)/sr row
        ],
        out_specs=pl.BlockSpec((b_tile, t_tile), lambda b, t: (b, t)),
        scratch_shapes=[
            pltpu.VMEM((b_tile, 1), jnp.float32),   # gate cumsum carry
            pltpu.VMEM((b_tile, 1), jnp.float32),   # freq cumsum carry
        ],
        compiler_params=pltpu.CompilerParams(
            dimension_semantics=("parallel", "arbitrary"),
            vmem_limit_bytes=vmem_limit),
    )(gate, frequency, tri, trow)


# ----------------------------------------------------------------------------
# Pure-JAX reference (same semantics as the PyTorch module) for validation
# ----------------------------------------------------------------------------
def fm_synth_reference(gate, frequency):
    B, T = gate.shape
    if frequency.shape[-1] == 1:
        frequency = jnp.broadcast_to(frequency, (B, T))
    gate = gate.astype(jnp.float32)
    frequency = frequency.astype(jnp.float32)

    t_on = jnp.cumsum(gate, axis=-1) / SAMPLE_RATE
    envelopes = [
        (1.0 - jnp.exp(-t_on / a)) * jnp.exp(-t_on / d) for (a, d) in EG_PARAMS
    ]

    operator_outputs = [None] * NUM_OPERATORS

    def render(n):
        if operator_outputs[n] is None:
            mods = [render(m) for m in MOD_SOURCES[n]]
            phase_mod = sum(mods) if mods else 0.0
            phase = TWO_PI * jnp.cumsum(frequency * RATIOS[n], axis=-1) / SAMPLE_RATE
            operator_outputs[n] = (
                jnp.sin(phase + phase_mod) * envelopes[n] * OPERATOR_GAINS[n]
            )
        return operator_outputs[n]

    return sum(render(t) for t in TERMINAL_OPS)


if __name__ == "__main__":
    key = jax.random.PRNGKey(0)
    B, T = 16, 256   # b_tile=8 -> 2 batch blocks (exercises the parallel axis)

    # Deterministic inputs: per-batch fundamental frequency, gate on for the
    # first half of the buffer.
    freq = jax.random.uniform(key, (B, 1), jnp.float32, minval=110.0, maxval=880.0)
    time_idx = jnp.arange(T, dtype=jnp.int32)
    gate = jnp.broadcast_to((time_idx < (T // 2)).astype(jnp.float32), (B, T))

    # 1) Constant-frequency fast path ([B, 1] frequency, as in the PyTorch demo).
    out = jax.block_until_ready(fm_synth_forward(gate, freq))
    ref = fm_synth_reference(gate, freq)
    np.testing.assert_allclose(np.asarray(out), np.asarray(ref), rtol=2e-3, atol=2e-3)

    # 2) Time-varying frequency path ([B, T]) exercises the hi/lo bf16 cumsum.
    vibrato = 1.0 + 0.01 * jnp.sin(
        TWO_PI * 5.0 * jnp.arange(T, dtype=jnp.float32) / SAMPLE_RATE)
    freq_tv = freq * vibrato[None, :]
    out_tv = jax.block_until_ready(fm_synth_forward(gate, freq_tv))
    ref_tv = fm_synth_reference(gate, freq_tv)
    np.testing.assert_allclose(np.asarray(out_tv), np.asarray(ref_tv),
                               rtol=2e-3, atol=2e-3)

    # 3) Force multiple time tiles (t_tile=128 on T=256) to exercise the
    #    blocked-cumsum carry scratch on both paths.
    out_blk = jax.block_until_ready(fm_synth_forward(gate, freq, t_tile=128))
    np.testing.assert_allclose(np.asarray(out_blk), np.asarray(ref),
                               rtol=2e-3, atol=2e-3)
    out_tv_blk = jax.block_until_ready(fm_synth_forward(gate, freq_tv, t_tile=128))
    np.testing.assert_allclose(np.asarray(out_tv_blk), np.asarray(ref_tv),
                               rtol=2e-3, atol=2e-3)

    print("KERNEL_OK")
</pallas_src>

<mosaic_0001>
module attributes {stable_mosaic.version = 11 : i64} {
  func.func @fm_synth_kernel(%arg0: i32, %arg1: i32, %arg2: memref<8x256xf32, #tpu.memory_space<vmem>>, %arg3: memref<8x1xf32, #tpu.memory_space<vmem>>, %arg4: memref<256x256xbf16, #tpu.memory_space<vmem>>, %arg5: memref<1x256xf32, #tpu.memory_space<vmem>>, %arg6: memref<8x256xf32, #tpu.memory_space<vmem>>, %arg7: memref<8x1xf32, #tpu.memory_space<vmem>>, %arg8: memref<8x1xf32, #tpu.memory_space<vmem>>) attributes {dimension_semantics = [#tpu.dimension_semantics<parallel>, #tpu.dimension_semantics<arbitrary>], iteration_bounds = array<i64: 2, 1>, scalar_prefetch = 0 : i64, scratch_operands = 2 : i64, tpu.core_type = #tpu.core_type<tc>, window_params = [{transform_indices = @transform_0, window_bounds = array<i64: 8, 256>}, {transform_indices = @transform_1, window_bounds = array<i64: 8, 1>}, {pipeline_mode = #tpu.pipeline_mode<synchronous>, transform_indices = @transform_2, window_bounds = array<i64: 256, 256>}, {transform_indices = @transform_3, window_bounds = array<i64: 1, 256>}, {transform_indices = @transform_4, window_bounds = array<i64: 8, 256>}]} {
    %c0_i32 = arith.constant 0 : i32
    %0 = arith.cmpi eq, %arg1, %c0_i32 : i32
    %1 = arith.extui %0 : i1 to i32
    %c0_i32_0 = arith.constant 0 : i32
    %2 = arith.cmpi ne, %1, %c0_i32_0 : i32
    scf.if %2 {
      %cst_27 = arith.constant 0.000000e+00 : f32
      %59 = vector.broadcast %cst_27 : f32 to vector<8x1xf32>
      %c0_28 = arith.constant 0 : index
      %c0_29 = arith.constant 0 : index
      %60 = vector.load %arg7[%c0_28, %c0_29] : memref<8x1xf32, #tpu.memory_space<vmem>>, vector<8x1xf32>
      tpu.vector_store %arg7[%c0_28, %c0_29], %59 {strides = array<i32>} : memref<8x1xf32, #tpu.memory_space<vmem>>, vector<8x1xf32>,
      %cst_30 = arith.constant 0.000000e+00 : f32
      %61 = vector.broadcast %cst_30 : f32 to vector<8x1xf32>
      %c0_31 = arith.constant 0 : index
      %c0_32 = arith.constant 0 : index
      %62 = vector.load %arg8[%c0_31, %c0_32] : memref<8x1xf32, #tpu.memory_space<vmem>>, vector<8x1xf32>
      tpu.vector_store %arg8[%c0_31, %c0_32], %61 {strides = array<i32>} : memref<8x1xf32, #tpu.memory_space<vmem>>, vector<8x1xf32>,
    } else {
    }
    %c0 = arith.constant 0 : index
    %c0_1 = arith.constant 0 : index
    %3 = vector.load %arg2[%c0, %c0_1] : memref<8x256xf32, #tpu.memory_space<vmem>>, vector<8x256xf32>
    %c0_2 = arith.constant 0 : index
    %c0_3 = arith.constant 0 : index
    %4 = vector.load %arg4[%c0_2, %c0_3] : memref<256x256xbf16, #tpu.memory_space<vmem>>, vector<256x256xbf16>
    %5 = arith.truncf %3 : vector<8x256xf32> to vector<8x256xbf16>
    %cst = arith.constant dense<0.000000e+00> : vector<8x256xf32>
    %6 = tpu.matmul %5, %4, %cst {dimension_numbers = #tpu.dot_dimension_numbers<[1], [0], [0], [1], [0, 0, 1, 1], [], []>} : vector<8x256xbf16>, vector<256x256xbf16>, vector<8x256xf32> -> vector<8x256xf32>
    %c0_4 = arith.constant 0 : index
    %c0_5 = arith.constant 0 : index
    %7 = vector.load %arg7[%c0_4, %c0_5] : memref<8x1xf32, #tpu.memory_space<vmem>>, vector<8x1xf32>
    %8 = vector.broadcast %7 : vector<8x1xf32> to vector<8x256xf32>
    %9 = arith.addf %6, %8 : vector<8x256xf32>
    %10 = vector.extract_strided_slice %9 {offsets = [0, 255], sizes = [8, 1], strides = [1, 1]} : vector<8x256xf32> to vector<8x1xf32>
    %c0_6 = arith.constant 0 : index
    %c0_7 = arith.constant 0 : index
    %11 = vector.load %arg7[%c0_6, %c0_7] : memref<8x1xf32, #tpu.memory_space<vmem>>, vector<8x1xf32>
    tpu.vector_store %arg7[%c0_6, %c0_7], %10 {strides = array<i32>} : memref<8x1xf32, #tpu.memory_space<vmem>>, vector<8x1xf32>,
    %c0_8 = arith.constant 0 : index
    %c0_9 = arith.constant 0 : index
    %12 = vector.load %arg3[%c0_8, %c0_9] : memref<8x1xf32, #tpu.memory_space<vmem>>, vector<8x1xf32>
    %c0_10 = arith.constant 0 : index
    %c0_11 = arith.constant 0 : index
    %13 = vector.load %arg5[%c0_10, %c0_11] : memref<1x256xf32, #tpu.memory_space<vmem>>, vector<1x256xf32>
    %14 = vector.broadcast %12 : vector<8x1xf32> to vector<8x256xf32>
    %15 = vector.broadcast %13 : vector<1x256xf32> to vector<8x256xf32>
    %16 = arith.mulf %14, %15 : vector<8x256xf32>
    %cst_12 = arith.constant 6.250000e-05 : f32
    %17 = vector.broadcast %cst_12 : f32 to vector<8x256xf32>
    %18 = arith.mulf %9, %17 : vector<8x256xf32>
    %cst_13 = arith.constant -2.000000e+02 : f32
    %19 = vector.broadcast %cst_13 : f32 to vector<8x256xf32>
    %20 = arith.mulf %18, %19 : vector<8x256xf32>
    %21 = math.exp %20 : vector<8x256xf32>
    %cst_14 = arith.constant 1.000000e+00 : f32
    %22 = vector.broadcast %cst_14 : f32 to vector<8x256xf32>
    %23 = arith.subf %22, %21 : vector<8x256xf32>
    %cst_15 = arith.constant -4.000000e+00 : f32
    %24 = vector.broadcast %cst_15 : f32 to vector<8x256xf32>
    %25 = arith.mulf %18, %24 : vector<8x256xf32>
    %26 = math.exp %25 : vector<8x256xf32>
    %27 = arith.mulf %23, %26 : vector<8x256xf32>
    %cst_16 = arith.constant -5.000000e+02 : f32
    %28 = vector.broadcast %cst_16 : f32 to vector<8x256xf32>
    %29 = arith.mulf %18, %28 : vector<8x256xf32>
    %30 = math.exp %29 : vector<8x256xf32>
    %cst_17 = arith.constant 1.000000e+00 : f32
    %31 = vector.broadcast %cst_17 : f32 to vector<8x256xf32>
    %32 = arith.subf %31, %30 : vector<8x256xf32>
    %cst_18 = arith.constant -1.000000e+01 : f32
    %33 = vector.broadcast %cst_18 : f32 to vector<8x256xf32>
    %34 = arith.mulf %18, %33 : vector<8x256xf32>
    %35 = math.exp %34 : vector<8x256xf32>
    %36 = arith.mulf %32, %35 : vector<8x256xf32>
    %cst_19 = arith.constant 2.000000e+00 : f32
    %37 = vector.broadcast %cst_19 : f32 to vector<8x256xf32>
    %38 = arith.mulf %16, %37 : vector<8x256xf32>
    %39 = math.floor %38 : vector<8x256xf32>
    %40 = arith.subf %38, %39 : vector<8x256xf32>
    %cst_20 = arith.constant 6.28318548 : f32
    %41 = vector.broadcast %cst_20 : f32 to vector<8x256xf32>
    %42 = arith.mulf %40, %41 : vector<8x256xf32>
    %43 = math.sin %42 : vector<8x256xf32>
    %44 = arith.mulf %43, %36 : vector<8x256xf32>
    %cst_21 = arith.constant 0.699999988 : f32
    %45 = vector.broadcast %cst_21 : f32 to vector<8x256xf32>
    %46 = arith.mulf %44, %45 : vector<8x256xf32>
    %cst_22 = arith.constant 1.000000e+00 : f32
    %47 = vector.broadcast %cst_22 : f32 to vector<8x256xf32>
    %48 = arith.mulf %16, %47 : vector<8x256xf32>
    %49 = math.floor %48 : vector<8x256xf32>
    %50 = arith.subf %48, %49 : vector<8x256xf32>
    %cst_23 = arith.constant 6.28318548 : f32
    %51 = vector.broadcast %cst_23 : f32 to vector<8x256xf32>
    %52 = arith.mulf %50, %51 : vector<8x256xf32>
    %53 = arith.addf %52, %46 : vector<8x256xf32>
    %54 = math.sin %53 : vector<8x256xf32>
    %55 = arith.mulf %54, %27 : vector<8x256xf32>
    %cst_24 = arith.constant 1.000000e+00 : f32
    %56 = vector.broadcast %cst_24 : f32 to vector<8x256xf32>
    %57 = arith.mulf %55, %56 : vector<8x256xf32>
    %c0_25 = arith.constant 0 : index
    %c0_26 = arith.constant 0 : index
    %58 = vector.load %arg6[%c0_25, %c0_26] : memref<8x256xf32, #tpu.memory_space<vmem>>, vector<8x256xf32>
    tpu.vector_store %arg6[%c0_25, %c0_26], %57 {strides = array<i32>} : memref<8x256xf32, #tpu.memory_space<vmem>>, vector<8x256xf32>,
    return
  }
  func.func @transform_0(%arg0: i32, %arg1: i32) -> (i32, i32) {
    %c0_i32 = arith.constant 0 : i32
    return %arg0, %arg1 : i32, i32
  }
  func.func @transform_1(%arg0: i32, %arg1: i32) -> (i32, i32) {
    %c0_i32 = arith.constant 0 : i32
    %c0_i32_0 = arith.constant 0 : i32
    return %arg0, %c0_i32 : i32, i32
  }
  func.func @transform_2(%arg0: i32, %arg1: i32) -> (i32, i32) {
    %c0_i32 = arith.constant 0 : i32
    %c0_i32_0 = arith.constant 0 : i32
    %c0_i32_1 = arith.constant 0 : i32
    return %c0_i32, %c0_i32_0 : i32, i32
  }
  func.func @transform_3(%arg0: i32, %arg1: i32) -> (i32, i32) {
    %c0_i32 = arith.constant 0 : i32
    %c0_i32_0 = arith.constant 0 : i32
    return %c0_i32, %arg1 : i32, i32
  }
  func.func @transform_4(%arg0: i32, %arg1: i32) -> (i32, i32) {
    %c0_i32 = arith.constant 0 : i32
    return %arg0, %arg1 : i32, i32
  }
}

</mosaic_0001>

<llo_original>
// kernel: tpu_custom_call.1
$region0: #{tpu_custom_call.1}
  #allocation0 [shape = 'u32[]', space=smem, size = 0x4, offset = 0x4, fixed_abs, tag = 'smem constant byte address 0x4 - core index']
  #allocation1 [shape = 'u32[144,128]{1,0:T(1,128)}', space=vmem, size = 0x12000, scoped, tag = 'internal scratch']
  #allocation2 [shape = 'f32[8,1]{1,0:T(8,128)}', space=vmem, size = 0x1000, scoped, tag = 'scratch operand']
  #allocation3 [shape = 'f32[8,1]{1,0:T(8,128)}', space=vmem, size = 0x1000, scoped, tag = 'scratch operand']
  %s0 = inlined_call_operand.hbm [shape: f32[16,256], index: 0, kind: input, shape index: {}]
  %s1 = inlined_call_operand.vmem [shape: f32[16,1], index: 1, kind: input, shape index: {}]
  %s2 = inlined_call_operand.hbm [shape: bf16[256,256], index: 2, kind: input, shape index: {}]
  %s3 = inlined_call_operand.vmem [shape: f32[1,256], index: 3, kind: input, shape index: {}]
  %s4 = inlined_call_operand.hbm [shape: f32[16,256], index: 4, kind: output, shape index: {}]
  %s5 = sld [smem:[#allocation0]]
  $region61: #{tpu_custom_call.1} parent=0
    _
  %s7 = ssub.s32 1, %s5
  %s8 = scalar_select 0, %s7, %s5
  $region1: #{tpu_custom_call.1} parent=0
    #allocation4 [shape = 'u8[16384]{0}', space=vmem, size = 0x4000, scoped, tag = 'input window, operand 0']
    #allocation5 [shape = 's32[2]{0}', space=sflag, size = 0x8, scoped, tag = 'scoped memory for tpu_custom_call.1']
    #allocation6 [shape = 's32[2]{0}', space=sflag, size = 0x8, scoped, tag = 'scoped memory for tpu_custom_call.1']
    #allocation7 [shape = 'u8[131072]{0}', space=vmem, size = 0x20000, scoped, tag = 'input window, operand 2, single buffered']
    #allocation8 [shape = 's32[1]{0}', space=sflag, size = 0x4, scoped, tag = 'scoped memory for tpu_custom_call.1']
    #allocation9 [shape = 'u8[16384]{0}', space=vmem, size = 0x4000, scoped, tag = 'output window, operand 0']
    %9 = vsyncpa [#allocation5], 0
    %s10 = scalar_lea.sflag [#allocation5], 1
    %11 = vsyncpa %s10, 0
    %12 = vsyncpa [#allocation8], 0
    %13 = vsyncpa [#allocation6], 0
    %s14 = scalar_lea.sflag [#allocation6], 1
    %15 = vsyncpa %s14, 0
    loop: start=0, step=1, limit=4
    $region2: #{tpu_custom_call.1} parent=1 // loop_pre_header
      _
    $region3: #{tpu_custom_call.1} parent=1 // loop_header
      %s17 = sphi 0, %s21
      %p18 = scmp.ge.s32.totalorder %s17, 4
      %s24 = sphi 0, %s36
      %s25 = sphi 0, %s32
      %s26 = sphi 0, %s24
      %s27 = sphi 0, %s25
      %s28 = sphi 0, %s26
      %s29 = sphi 0, %s27
      %s41 = sphi 0, %s43
      %s44 = sphi 0, %s41
      %s45 = sphi 0, %s44
      %s61 = sphi 0, %s45
      %s67 = sphi 0, %s69
      %s70 = sphi 0, %s67
      %s71 = sphi 0, %s70
      %s87 = sphi 0, %s71
      %s91 = sphi 0, %s91
      %s93 = sphi 0, %s91
      %s94 = sphi 0, %s93
      %s108 = sphi 0, %s94
      %s114 = sphi 0, %s116
      %s117 = sphi 0, %s114
      %s118 = sphi 0, %s117
      %s134 = sphi 0, %s118
      %s142 = sphi 0, %s144
      %s145 = sphi 0, %s142
      %s146 = sphi 0, %s145
      %s162 = sphi 0, %s146
    $region4: #{tpu_custom_call.1} parent=1 // loop_header_branch
      %20 = sbr.rel (%p18) target = $region8
    $region5: #{tpu_custom_call.1} parent=1 // loop_body
      %s22 = ssub.s32 %s17, 1
      %s23 = ssub.s32 %s17, 2
      %s30 = sadd.s32 1, %s25
      %p31 = scmp.ge.s32.totalorder %s30, 1
      %s32 = scalar_select %p31, 0, %s30
      %s33 = sadd.s32 1, %s24
      %s34 = scalar_select %p31, %s33, %s24
      %p35 = scmp.ge.s32.totalorder %s34, 2
      %s36 = scalar_select %p35, 0, %s34
      %s37 = ssub.s32 %s24, %s36
      %s38 = ssub.s32 %s25, %s32
      %s39 = sor.u32 %s37, %s38
      %p40 = scmp.eq.s32.totalorder %s39, 0
      %s42 = sadd.s32 %s41, 1
      %s43 = scalar_select %p40, %s41, %s42
      %p46 = pneg %p40
      %p47 = scmp.eq.s32.totalorder %s17, 1
      %p48 = por %p46, %p47
      %p49 = scmp.ne.s32.totalorder %s41, %s44
      %p50 = scmp.eq.s32.totalorder %s17, 0
      %p51 = por %p49, %p50
      %p52 = scmp.ne.s32.totalorder %s41, %s44
      %p53 = scmp.eq.s32.totalorder %s22, 1
      %p54 = por %p52, %p53
      %p55 = scmp.ne.s32.totalorder %s44, %s45
      %p56 = scmp.eq.s32.totalorder %s22, 0
      %p57 = por %p55, %p56
      %p58 = scmp.ne.s32.totalorder %s44, %s45
      %p59 = scmp.eq.s32.totalorder %s23, 1
      %p60 = por %p58, %p59
      %p62 = scmp.ne.s32.totalorder %s45, %s61
      %p63 = scmp.eq.s32.totalorder %s23, 0
      %p64 = por %p62, %p63
      %s65 = ssub.s32 %s24, %s36
      %p66 = scmp.eq.s32.totalorder %s65, 0
      %s68 = sadd.s32 %s67, 1
      %s69 = scalar_select %p66, %s67, %s68
      %p72 = pneg %p66
      %p73 = scmp.eq.s32.totalorder %s17, 1
      %p74 = por %p72, %p73
      %p75 = scmp.ne.s32.totalorder %s67, %s70
      %p76 = scmp.eq.s32.totalorder %s17, 0
      %p77 = por %p75, %p76
      %p78 = scmp.ne.s32.totalorder %s67, %s70
      %p79 = scmp.eq.s32.totalorder %s22, 1
      %p80 = por %p78, %p79
      %p81 = scmp.ne.s32.totalorder %s70, %s71
      %p82 = scmp.eq.s32.totalorder %s22, 0
      %p83 = por %p81, %p82
      %p84 = scmp.ne.s32.totalorder %s70, %s71
      %p85 = scmp.eq.s32.totalorder %s23, 1
      %p86 = por %p84, %p85
      %p88 = scmp.ne.s32.totalorder %s71, %s87
      %p89 = scmp.eq.s32.totalorder %s23, 0
      %p90 = por %p88, %p89
      %s92 = sadd.s32 %s91, 1
      %p95 = scmp.eq.s32.totalorder %s17, 1
      %p96 = scmp.ne.s32.totalorder %s91, %s93
      %p97 = scmp.eq.s32.totalorder %s17, 0
      %p98 = por %p96, %p97
      %p99 = scmp.ne.s32.totalorder %s91, %s93
      %p100 = scmp.eq.s32.totalorder %s22, 1
      %p101 = por %p99, %p100
      %p102 = scmp.ne.s32.totalorder %s93, %s94
      %p103 = scmp.eq.s32.totalorder %s22, 0
      %p104 = por %p102, %p103
      %p105 = scmp.ne.s32.totalorder %s93, %s94
      %p106 = scmp.eq.s32.totalorder %s23, 1
      %p107 = por %p105, %p106
      %p109 = scmp.ne.s32.totalorder %s94, %s108
      %p110 = scmp.eq.s32.totalorder %s23, 0
      %p111 = por %p109, %p110
      %s112 = ssub.s32 %s25, %s32
      %p113 = scmp.eq.s32.totalorder %s112, 0
      %s115 = sadd.s32 %s114, 1
      %s116 = scalar_select %p113, %s114, %s115
      %p119 = pneg %p113
      %p120 = scmp.eq.s32.totalorder %s17, 1
      %p121 = por %p119, %p120
      %p122 = scmp.ne.s32.totalorder %s114, %s117
      %p123 = scmp.eq.s32.totalorder %s17, 0
      %p124 = por %p122, %p123
      %p125 = scmp.ne.s32.totalorder %s114, %s117
      %p126 = scmp.eq.s32.totalorder %s22, 1
      %p127 = por %p125, %p126
      %p128 = scmp.ne.s32.totalorder %s117, %s118
      %p129 = scmp.eq.s32.totalorder %s22, 0
      %p130 = por %p128, %p129
      %p131 = scmp.ne.s32.totalorder %s117, %s118
      %p132 = scmp.eq.s32.totalorder %s23, 1
      %p133 = por %p131, %p132
      %p135 = scmp.ne.s32.totalorder %s118, %s134
      %p136 = scmp.eq.s32.totalorder %s23, 0
      %p137 = por %p135, %p136
      %s138 = ssub.s32 %s24, %s36
      %s139 = ssub.s32 %s25, %s32
      %s140 = sor.u32 %s138, %s139
      %p141 = scmp.eq.s32.totalorder %s140, 0
      %s143 = sadd.s32 %s142, 1
      %s144 = scalar_select %p141, %s142, %s143
      %p147 = pneg %p141
      %p148 = scmp.eq.s32.totalorder %s17, 1
      %p149 = por %p147, %p148
      %p150 = scmp.ne.s32.totalorder %s142, %s145
      %p151 = scmp.eq.s32.totalorder %s17, 0
      %p152 = por %p150, %p151
      %p153 = scmp.ne.s32.totalorder %s142, %s145
      %p154 = scmp.eq.s32.totalorder %s22, 1
      %p155 = por %p153, %p154
      %p156 = scmp.ne.s32.totalorder %s145, %s146
      %p157 = scmp.eq.s32.totalorder %s22, 0
      %p158 = por %p156, %p157
      %p159 = scmp.ne.s32.totalorder %s145, %s146
      %p160 = scmp.eq.s32.totalorder %s23, 1
      %p161 = por %p159, %p160
      %p163 = scmp.ne.s32.totalorder %s146, %s162
      %p164 = scmp.eq.s32.totalorder %s23, 0
      %p165 = por %p163, %p164
      %p166 = scmp.le.s32.totalorder 1, %s17
      %p167 = scmp.lt.s32.totalorder %s17, 3
      %p168 = pnand %p166, %p167
      %p169 = pneg %p168
      // Predicated region
      $region9: #{tpu_custom_call.1} parent=5 // pred_check
        _
      $region10: #{tpu_custom_call.1} parent=5 // pred_check_branch
        %171 = sbr.rel (%p168) target = $region12
      $region11: #{tpu_custom_call.1} parent=5 // pred_region
        %s172 = ssub.s32 %s17, 1
        // Predicated region
        $region13: #{tpu_custom_call.1} parent=11 // pred_check
          %p173 = pneg %p104
        $region14: #{tpu_custom_call.1} parent=11 // pred_check_branch
          %175 = sbr.rel (%p173) target = $region16
        $region15: #{tpu_custom_call.1} parent=11 // pred_region
          %s177 = ssub.s32 4096, 4096
          %178 = vsyncadd [#allocation8], %s177
          %s179 = sshll.u32 [#allocation7], 4
          %s180 = int_to_ptr.vmem [resolvable:$true] %s179
          %185 = dma.hbm_to_vmem [thread:$0]  %s2, 4096, %s180, [#allocation8], 128, 128, 8
        $region16: #{tpu_custom_call.1} parent=11 // pred_fallthru
          _
        // Predicated region
        $region17: #{tpu_custom_call.1} parent=11 // pred_check
          %p186 = pneg %p130
        $region18: #{tpu_custom_call.1} parent=11 // pred_check_branch
          %188 = sbr.rel (%p186) target = $region20
        $region19: #{tpu_custom_call.1} parent=11 // pred_region
          %s189 = smul.u32 2, %s27
          %p190 = scmp.lt.s32.totalorder %s189, 1
          %s191 = scalar_select %p190, %s189, 1
          %s192 = scalar_lea.vmem %s3, %s191
          %s193 = smul.u32 2, %s27
        $region20: #{tpu_custom_call.1} parent=11 // pred_fallthru
          _
      $region12: #{tpu_custom_call.1} parent=5 // pred_fallthru
        _
      %p194 = scmp.lt.s32.totalorder %s17, 2
      // Predicated region
      $region21: #{tpu_custom_call.1} parent=5 // pred_check
        %p195 = pneg %p194
      $region22: #{tpu_custom_call.1} parent=5 // pred_check_branch
        %197 = sbr.rel (%p195) target = $region24
      $region23: #{tpu_custom_call.1} parent=5 // pred_region
        // Predicated region
        $region25: #{tpu_custom_call.1} parent=23 // pred_check
          %p198 = pneg %p51
        $region26: #{tpu_custom_call.1} parent=23 // pred_check_branch
          %200 = sbr.rel (%p198) target = $region28
        $region27: #{tpu_custom_call.1} parent=23 // pred_region
          %s201 = sand.u32 %s41, 1
          %s202 = scalar_lea.sflag [#allocation5], %s201
          %s203 = sand.u32 %s41, 1
          %s204 = smul.addr %s203, 16
          %s205 = scalar_lea.vmem [#allocation4], %s204
          %s206 = smul.u32 2, %s25
          %s208 = ssub.s32 256, 256
          %209 = vsyncadd %s202, %s208
          %s210 = smul.addr %s24, 2
          %s211 = sadd.s32 %s206, %s210
          %s212 = smul.addr %s211, 128
          %s213 = scalar_lea.hbm %s0, %s212
          %s215 = sshll.u32 %s205, 4
          %s216 = int_to_ptr.vmem [resolvable:$true] %s215
          %218 = dma.hbm_to_vmem [thread:$0]  %s213, 256, %s216, %s202
        $region28: #{tpu_custom_call.1} parent=23 // pred_fallthru
          _
        // Predicated region
        $region29: #{tpu_custom_call.1} parent=23 // pred_check
          %p219 = pneg %p77
        $region30: #{tpu_custom_call.1} parent=23 // pred_check_branch
          %221 = sbr.rel (%p219) target = $region32
        $region31: #{tpu_custom_call.1} parent=23 // pred_region
          %p222 = scmp.lt.s32.totalorder %s24, 1
          %s223 = scalar_select %p222, %s24, 1
          %s224 = smul.addr %s223, 8
          %s225 = scalar_lea.vmem %s1, %s224
        $region32: #{tpu_custom_call.1} parent=23 // pred_fallthru
          _
      $region24: #{tpu_custom_call.1} parent=5 // pred_fallthru
        _
      %p226 = scmp.le.s32.totalorder 1, %s17
      %p227 = scmp.lt.s32.totalorder %s17, 3
      %p228 = pnand %p226, %p227
      %p229 = pneg %p228
      // Predicated region
      $region33: #{tpu_custom_call.1} parent=5 // pred_check
        _
      $region34: #{tpu_custom_call.1} parent=5 // pred_check_branch
        %231 = sbr.rel (%p228) target = $region36
      $region35: #{tpu_custom_call.1} parent=5 // pred_region
        %s232 = ssub.s32 %s17, 1
        %s233 = sand.u32 %s44, 1
        %s234 = scalar_lea.sflag [#allocation5], %s233
        %s235 = sand.u32 %s44, 1
        %s236 = smul.addr %s235, 16
        %s237 = scalar_lea.vmem [#allocation4], %s236
        // Predicated region
        $region37: #{tpu_custom_call.1} parent=35 // pred_check
          %p238 = pneg %p57
        $region38: #{tpu_custom_call.1} parent=35 // pred_check_branch
          %240 = sbr.rel (%p238) target = $region40
        $region39: #{tpu_custom_call.1} parent=35 // pred_region
          %241 = dma.done %s234, 256
        $region40: #{tpu_custom_call.1} parent=35 // pred_fallthru
          _
        // Predicated region
        $region41: #{tpu_custom_call.1} parent=35 // pred_check
          %p242 = pneg %p104
        $region42: #{tpu_custom_call.1} parent=35 // pred_check_branch
          %244 = sbr.rel (%p242) target = $region44
        $region43: #{tpu_custom_call.1} parent=35 // pred_region
          %245 = dma.done [#allocation8], 4096
        $region44: #{tpu_custom_call.1} parent=35 // pred_fallthru
          _
        %s246 = sand.u32 %s44, 1
        %s247 = scalar_lea.sflag [#allocation5], %s246
        %s248 = sand.u32 %s44, 1
        %s249 = smul.addr %s248, 16
        %s250 = scalar_lea.vmem [#allocation4], %s249
        %p251 = pneg %p57
        %p252 = pneg %p54
        %p253 = scmp.lt.s32.totalorder %s26, 1
        %s254 = scalar_select %p253, %s26, 1
        %s255 = smul.addr %s254, 8
        %s256 = scalar_lea.vmem %s1, %s255
        %p257 = pneg %p83
        %p258 = pneg %p80
        %p259 = pneg %p104
        %p260 = pneg %p101
        %s261 = smul.u32 2, %s27
        %p262 = scmp.lt.s32.totalorder %s261, 1
        %s263 = scalar_select %p262, %s261, 1
        %s264 = scalar_lea.vmem %s3, %s263
        %p265 = pneg %p130
        %p266 = pneg %p127
        %p267 = pneg %p158
        %p268 = pneg %p155
        %s269 = sand.u32 %s145, 1
        %s270 = scalar_lea.sflag [#allocation6], %s269
        %s271 = sand.u32 %s145, 1
        %s272 = smul.addr %s271, 16
        %s273 = scalar_lea.vmem [#allocation9], %s272
        %s274 = smul.u32 2, %s27
        %p275 = scmp.lt.s32.totalorder %s26, 1
        %s276 = scalar_select %p275, %s26, 1
        %s277 = smul.addr %s276, 8
        %s278 = scalar_lea.vmem %s1, %s277
        %s279 = smul.u32 2, %s27
        %p280 = scmp.lt.s32.totalorder %s279, 1
        %s281 = scalar_select %p280, %s279, 1
        %s282 = scalar_lea.vmem %s3, %s281
        %s283 = smul.u32 2, %s27
        %s284 = smul.u32 2, %s27
        %p285 = scmp.eq.s32.totalorder %s27, 0
        // Predicated region
        $region45: #{tpu_custom_call.1} parent=35 // pred_check
          %p286 = pneg %p285
        $region46: #{tpu_custom_call.1} parent=35 // pred_check_branch
          %288 = sbr.rel (%p286) target = $region48
        $region47: #{tpu_custom_call.1} parent=35 // pred_region
          %vm289 = vcmask 7168
          %290 = vst.msk [vmem:[#allocation2] sm:$0xff] %vm289, 0.0
          %291 = vst.msk [vmem:[#allocation3] sm:$0xff] %vm289, 0.0
        $region48: #{tpu_custom_call.1} parent=35 // pred_fallthru
          _
        %v292 = vld [vmem:[%s237] sm:$0xff]
        %v293 = vld [vmem:[%s237 + $0x8] sm:$0xff]
        %v294 = vld [vmem:[#allocation7] sm:$0xff]
        %v295 = vld [vmem:[#allocation7 + $0x8] sm:$0xff]
        %v296 = vld [vmem:[#allocation7 + $0x10] sm:$0xff]
        %v297 = vld [vmem:[#allocation7 + $0x18] sm:$0xff]
        %v298 = vld [vmem:[#allocation7 + $0x20] sm:$0xff]
        %v299 = vld [vmem:[#allocation7 + $0x28] sm:$0xff]
        %v300 = vld [vmem:[#allocation7 + $0x30] sm:$0xff]
        %v301 = vld [vmem:[#allocation7 + $0x38] sm:$0xff]
        %v302 = vld [vmem:[#allocation7 + $0x40] sm:$0xff]
        %v303 = vld [vmem:[#allocation7 + $0x48] sm:$0xff]
        %v304 = vld [vmem:[#allocation7 + $0x50] sm:$0xff]
        %v305 = vld [vmem:[#allocation7 + $0x58] sm:$0xff]
        %v306 = vld [vmem:[#allocation7 + $0x60] sm:$0xff]
        %v307 = vld [vmem:[#allocation7 + $0x68] sm:$0xff]
        %v308 = vld [vmem:[#allocation7 + $0x70] sm:$0xff]
        %v309 = vld [vmem:[#allocation7 + $0x78] sm:$0xff]
        %v310 = vld [vmem:[#allocation7 + $0x80] sm:$0xff]
        %v311 = vld [vmem:[#allocation7 + $0x88] sm:$0xff]
        %v312 = vld [vmem:[#allocation7 + $0x90] sm:$0xff]
        %v313 = vld [vmem:[#allocation7 + $0x98] sm:$0xff]
        %v314 = vld [vmem:[#allocation7 + $0xa0] sm:$0xff]
        %v315 = vld [vmem:[#allocation7 + $0xa8] sm:$0xff]
        %v316 = vld [vmem:[#allocation7 + $0xb0] sm:$0xff]
        %v317 = vld [vmem:[#allocation7 + $0xb8] sm:$0xff]
        %v318 = vld [vmem:[#allocation7 + $0xc0] sm:$0xff]
        %v319 = vld [vmem:[#allocation7 + $0xc8] sm:$0xff]
        %v320 = vld [vmem:[#allocation7 + $0xd0] sm:$0xff]
        %v321 = vld [vmem:[#allocation7 + $0xd8] sm:$0xff]
        %v322 = vld [vmem:[#allocation7 + $0xe0] sm:$0xff]
        %v323 = vld [vmem:[#allocation7 + $0xe8] sm:$0xff]
        %v324 = vld [vmem:[#allocation7 + $0xf0] sm:$0xff]
        %v325 = vld [vmem:[#allocation7 + $0xf8] sm:$0xff]
        %v326 = vpack.c.bf16 %v292, %v292
        %v327 = vpack.c.bf16 %v293, %v293
        %v328 = vld [vmem:[#allocation2] sm:$0xff]
        %330 = vset.pattern.permute.xlu0 0
        %331 = vperm.xlu0 %330, %v328
        %v332 = vpop.permute.xlu0 %331
        %v366 = vunpack.c.l.b16 %v294
        %v367 = vunpack.c.h.b16 %v294
        %v368 = vunpack.c.l.b16 %v295
        %v369 = vunpack.c.h.b16 %v295
        %v370 = vunpack.c.l.b16 %v296
        %v371 = vunpack.c.h.b16 %v296
        %v372 = vunpack.c.l.b16 %v297
        %v373 = vunpack.c.h.b16 %v297
        %v374 = vunpack.c.l.b16 %v298
        %v375 = vunpack.c.h.b16 %v298
        %v376 = vunpack.c.l.b16 %v299
        %v377 = vunpack.c.h.b16 %v299
        %v378 = vunpack.c.l.b16 %v300
        %v379 = vunpack.c.h.b16 %v300
        %v380 = vunpack.c.l.b16 %v301
        %v381 = vunpack.c.h.b16 %v301
        %v382 = vunpack.c.l.b16 %v302
        %v383 = vunpack.c.h.b16 %v302
        %v384 = vunpack.c.l.b16 %v303
        %v385 = vunpack.c.h.b16 %v303
        %v386 = vunpack.c.l.b16 %v304
        %v387 = vunpack.c.h.b16 %v304
        %v388 = vunpack.c.l.b16 %v305
        %v389 = vunpack.c.h.b16 %v305
        %v390 = vunpack.c.l.b16 %v306
        %v391 = vunpack.c.h.b16 %v306
        %v392 = vunpack.c.l.b16 %v307
        %v393 = vunpack.c.h.b16 %v307
        %v394 = vunpack.c.l.b16 %v308
        %v395 = vunpack.c.h.b16 %v308
        %v396 = vunpack.c.l.b16 %v309
        %v397 = vunpack.c.h.b16 %v309
        %v398 = vunpack.c.l.b16 %v310
        %v399 = vunpack.c.h.b16 %v310
        %v400 = vunpack.c.l.b16 %v311
        %v401 = vunpack.c.h.b16 %v311
        %v402 = vunpack.c.l.b16 %v312
        %v403 = vunpack.c.h.b16 %v312
        %v404 = vunpack.c.l.b16 %v313
        %v405 = vunpack.c.h.b16 %v313
        %v406 = vunpack.c.l.b16 %v314
        %v407 = vunpack.c.h.b16 %v314
        %v408 = vunpack.c.l.b16 %v315
        %v409 = vunpack.c.h.b16 %v315
        %v410 = vunpack.c.l.b16 %v316
        %v411 = vunpack.c.h.b16 %v316
        %v412 = vunpack.c.l.b16 %v317
        %v413 = vunpack.c.h.b16 %v317
        %v414 = vunpack.c.l.b16 %v318
        %v415 = vunpack.c.h.b16 %v318
        %v416 = vunpack.c.l.b16 %v319
        %v417 = vunpack.c.h.b16 %v319
        %v418 = vunpack.c.l.b16 %v320
        %v419 = vunpack.c.h.b16 %v320
        %v420 = vunpack.c.l.b16 %v321
        %v421 = vunpack.c.h.b16 %v321
        %v422 = vunpack.c.l.b16 %v322
        %v423 = vunpack.c.h.b16 %v322
        %v424 = vunpack.c.l.b16 %v323
        %v425 = vunpack.c.h.b16 %v323
        %v426 = vunpack.c.l.b16 %v324
        %v427 = vunpack.c.h.b16 %v324
        %v428 = vunpack.c.l.b16 %v325
        %v429 = vunpack.c.h.b16 %v325
        %v430 = vpack.c.b16 %v368, %v366
        %v431 = vpack.c.b16 %v369, %v367
        %v432 = vpack.c.b16 %v372, %v370
        %v433 = vpack.c.b16 %v373, %v371
        %v434 = vpack.c.b16 %v376, %v374
        %v435 = vpack.c.b16 %v377, %v375
        %v436 = vpack.c.b16 %v380, %v378
        %v437 = vpack.c.b16 %v381, %v379
        %v438 = vpack.c.b16 %v384, %v382
        %v439 = vpack.c.b16 %v385, %v383
        %v440 = vpack.c.b16 %v388, %v386
        %v441 = vpack.c.b16 %v389, %v387
        %v442 = vpack.c.b16 %v392, %v390
        %v443 = vpack.c.b16 %v393, %v391
        %v444 = vpack.c.b16 %v396, %v394
        %v445 = vpack.c.b16 %v397, %v395
        %v446 = vpack.c.b16 %v400, %v398
        %v447 = vpack.c.b16 %v401, %v399
        %v448 = vpack.c.b16 %v404, %v402
        %v449 = vpack.c.b16 %v405, %v403
        %v450 = vpack.c.b16 %v408, %v406
        %v451 = vpack.c.b16 %v409, %v407
        %v452 = vpack.c.b16 %v412, %v410
        %v453 = vpack.c.b16 %v413, %v411
        %v454 = vpack.c.b16 %v416, %v414
        %v455 = vpack.c.b16 %v417, %v415
        %v456 = vpack.c.b16 %v420, %v418
        %v457 = vpack.c.b16 %v421, %v419
        %v458 = vpack.c.b16 %v424, %v422
        %v459 = vpack.c.b16 %v425, %v423
        %v460 = vpack.c.b16 %v428, %v426
        %v461 = vpack.c.b16 %v429, %v427
        %494 = vmatprep.subr.bf16.mxu0 %v445
        %495 = vmatpush1.bf16.msra.mxu0 %v444
        %496 = vmatprep.subr.bf16.mxu0 %v443
        %497 = vmatpush1.bf16.msra.mxu0 %v442
        %498 = vmatprep.subr.bf16.mxu0 %v441
        %499 = vmatpush1.bf16.msra.mxu0 %v440
        %500 = vmatprep.subr.bf16.mxu0 %v439
        %501 = vmatpush1.bf16.msra.mxu0 %v438
        %502 = vmatprep.subr.bf16.mxu0 %v437
        %503 = vmatpush1.bf16.msra.mxu0 %v436
        %504 = vmatprep.subr.bf16.mxu0 %v435
        %505 = vmatpush1.bf16.msra.mxu0 %v434
        %506 = vmatprep.subr.bf16.mxu0 %v433
        %507 = vmatpush1.bf16.msra.mxu0 %v432
        %508 = vmatprep.subr.bf16.mxu0 %v431
        %509 = vmatpush1.bf16.msra.mxu0 %v430
        %510 = vmatprep.subr.bf16.mxu0 %v461
        %511 = vmatpush2.bf16.msra.mxu0 %v460
        %512 = vmatprep.subr.bf16.mxu0 %v459
        %513 = vmatpush2.bf16.msra.mxu0 %v458
        %514 = vmatprep.subr.bf16.mxu0 %v457
        %515 = vmatpush2.bf16.msra.mxu0 %v456
        %516 = vmatprep.subr.bf16.mxu0 %v455
        %517 = vmatpush2.bf16.msra.mxu0 %v454
        %518 = vmatprep.subr.bf16.mxu0 %v453
        %519 = vmatpush2.bf16.msra.mxu0 %v452
        %520 = vmatprep.subr.bf16.mxu0 %v451
        %521 = vmatpush2.bf16.msra.mxu0 %v450
        %522 = vmatprep.subr.bf16.mxu0 %v449
        %523 = vmatpush2.bf16.msra.mxu0 %v448
        %524 = vmatprep.subr.bf16.mxu0 %v447
        %525 = vmatpush2.bf16.msra.mxu0 %v446
        %526 = vmatprep.mubr.bf16.mxu0 %v327
        %527 = vmatmul.mubr.bf16.gmra.mxu0 %v326
        %v528 = vpop.f32.mrf.mxu0
        %v529 = vadd.f32 %v332, %v528
        %v530 = vpop.f32.mrf.mxu0
        %v531 = vadd.f32 %v332, %v530
        %v532 = vpop.f32.mrf.mxu0
        %v533 = vpop.f32.mrf.mxu0
        %534 = vdwg.mxu0
        %536 = vrot.lane.b32.xlu0 %v531, 1
        %v537 = vpop.permute.xlu0 %536
        %vm539 = vcmask 7168
        %540 = vst.msk [vmem:[#allocation2] sm:$0xff] %vm539, %v537
        %v541 = vld [vmem:[%s278] sm:$0xff]
        %v542 = vld [vmem:[%s282] sm:$0x3]
        %544 = vset.pattern.permute.xlu0 0
        %545 = vperm.xlu0 %544, %v541
        %v546 = vpop.permute.xlu0 %545
        %v549 = vlaneseq
        %v550 = vshrl.u32 %v549, 7
        %v551 = vsub.s32 0, %v550
        %v552 = vrot.slane %v542, %v551
        %v553 = vlaneseq
        %v554 = vshrl.u32 %v553, 7
        %v555 = vsub.s32 1, %v554
        %v556 = vrot.slane %v542, %v555
        %v559 = vmul.f32 %v546, %v552
        %v560 = vmul.f32 %v546, %v556
        %v561 = vmul.f32 %v529, 6.25e-05
        %v562 = vmul.f32 %v531, 6.25e-05
        %v563 = vmul.f32 %v561, -200.0
        %v564 = vmul.f32 %v562, -200.0
        %v565 = vmul.f32 %v563, 1.442695
        %v566 = vpow.pop %v565
        %v567 = vmul.f32 %v564, 1.442695
        %v568 = vpow.pop %v567
        %v569 = vsub.f32 1.0, %v566
        %v570 = vsub.f32 1.0, %v568
        %v571 = vmul.f32 %v561, -4.0
        %v572 = vmul.f32 %v562, -4.0
        %v573 = vmul.f32 %v571, 1.442695
        %v574 = vpow.pop %v573
        %v575 = vmul.f32 %v572, 1.442695
        %v576 = vpow.pop %v575
        %v577 = vmul.f32 %v569, %v574
        %v578 = vmul.f32 %v570, %v576
        %v579 = vmul.f32 %v561, -500.0
        %v580 = vmul.f32 %v562, -500.0
        %v581 = vmul.f32 %v579, 1.442695
        %v582 = vpow.pop %v581
        %v583 = vmul.f32 %v580, 1.442695
        %v584 = vpow.pop %v583
        %v585 = vsub.f32 1.0, %v582
        %v586 = vsub.f32 1.0, %v584
        %v587 = vmul.f32 %v561, -10.0
        %v588 = vmul.f32 %v562, -10.0
        %v589 = vmul.f32 %v587, 1.442695
        %v590 = vpow.pop %v589
        %v591 = vmul.f32 %v588, 1.442695
        %v592 = vpow.pop %v591
        %v593 = vmul.f32 %v585, %v590
        %v594 = vmul.f32 %v586, %v592
        %v595 = vmul.f32 %v559, 2.0
        %v596 = vmul.f32 %v560, 2.0
        %v597 = vfloor.f32 %v595
        %v598 = vfloor.f32 %v596
        %v599 = vsub.f32 %v595, %v597
        %v600 = vsub.f32 %v596, %v598
        %v601 = vmul.f32 %v599, 6.2831855
        %v602 = vmul.f32 %v600, 6.2831855
        %v603 = vand.u32 2147483647, %v601
        %vm604 = vcmp.le.f32.partialorder %v603, 0.7853982
        %vm605 = vcmp.lt.s32.totalorder %v601, 0
        %v606 = vand.u32 %v601, 2139095040
        %v607 = vshrl.u32 %v606, 23
        %v608 = vsub.s32 %v607, 127
        %v609 = vand.u32 2147483647, %v601
        %v610 = vand.u32 %v609, 8388607
        %v611 = vor.u32 %v610, 8388608
        %v612 = vsub.s32 0, %v611
        %v613 = vadd.s32 %v608, 1
        %vm614 = vcmp.gt.s32.totalorder %v613, 0
        %v615 = vsel %vm614, %v613, 0
        %v616 = vshrl.u32 %v615, 5
        %v617 = vand.u32 %v615, 31
        %v618 = vsub.s32 32, %v617
        %v619 = vshrl.u32 683565275, %v618
        %v620 = vshll.u32 683565275, %v617
        %v621 = vshrl.u32 2475754826, %v618
        %v622 = vor.u32 %v620, %v621
        %v623 = vshll.u32 2475754826, %v617
        %v624 = vshrl.u32 2131351028, %v618
        %v625 = vor.u32 %v623, %v624
        %v626 = vshll.u32 2131351028, %v617
        %v627 = vshrl.u32 2102212464, %v618
        %v628 = vor.u32 %v626, %v627
        %v629 = vshll.u32 2102212464, %v617
        %v630 = vshrl.u32 920167782, %v618
        %v631 = vor.u32 %v629, %v630
        %v632 = vshll.u32 920167782, %v617
        %v633 = vshrl.u32 1326507024, %v618
        %v634 = vor.u32 %v632, %v633
        %vm635 = vcmp.lt.s32.totalorder %v616, 1
        %vm636 = vcmp.lt.s32.totalorder %v616, 2
        %vm637 = vcmp.lt.s32.totalorder %v616, 3
        %vm638 = vcmp.lt.s32.totalorder %v616, 4
        %v639 = vsel %vm635, %v619, %v622
        %v640 = vsel %vm638, %v628, 2102212464
        %v641 = vsel %vm637, %v625, %v640
        %v642 = vsel %vm636, %v639, %v641
        %v643 = vsel %vm635, %v622, %v625
        %v644 = vsel %vm638, %v631, 920167782
        %v645 = vsel %vm637, %v628, %v644
        %v646 = vsel %vm636, %v643, %v645
        %v647 = vsel %vm635, %v625, %v628
        %v648 = vsel %vm638, %v634, 1326507024
        %v649 = vsel %vm637, %v631, %v648
        %v650 = vsel %vm636, %v647, %v649
        %v651 = vshll.u32 %v611, 8
        %v652 = vmul.u32.u64.compose %v651, %v650
        %v653 = vextract.low.u32 %v652
        %v654 = vextract.high.u32 %v652
        %v655 = vmul.u32.u64.compose %v651, %v646
        %v656 = vextract.low.u32 %v655
        %v657 = vextract.high.u32 %v655
        %v658 = vmul.u32 %v651, %v642
        %v659 = vadd.s32 %v654, %v656
        %vm660 = vc.u32 %v654, %v656
        %v661 = vadd.s32 %v657, 1
        %v662 = vsel %vm660, %v661, %v657
        %v663 = vadd.s32 %v658, %v662
        %v664 = vadd.s32 %v663, 536870912
        %v665 = vshrl.u32 %v664, 30
        %v666 = vshll.u32 %v665, 30
        %v667 = vsub.s32 %v663, %v666
        %vm668 = vcmp.lt.s32.totalorder %v667, 0
        %v669 = vsub.s32 0, %v667
        %v670 = vsel %vm668, %v669, %v667
        %v671 = vclz %v670
        %v672 = vsub.s32 %v671, 2
        %vm673 = vcmp.gt.s32.totalorder 0, %v672
        %v674 = vsel %vm673, 0, %v672
        %v675 = vsub.s32 32, %v674
        %v676 = vshll.u32 %v667, %v674
        %v677 = vshrl.u32 %v659, %v675
        %v678 = vor.u32 %v676, %v677
        %v679 = vsub.s32 4294967266, %v674
        %v680 = vadd.s32 %v679, 127
        %v681 = vshll.u32 %v680, 23
        %v682 = vor.u32 4788187, %v681
        %v683 = vand.u32 2147483647, %v682
        %v685 = vcvt.s32.f32 %v678
        %v686 = vmul.f32 %v685, %v683
        %v687 = vxor.u32 %v686, 2147483648
        %v688 = vsel %vm605, %v687, %v686
        %v689 = vsub.s32 4, %v665
        %v690 = vsel %vm605, %v689, %v665
        %v691 = vsel %vm604, %v601, %v688
        %v692 = vsel %vm604, 0, %v690
        %v693 = vcosq.f32.pop %v691
        %v694 = vsinq.f32.pop %v691
        %vm695 = vweird.f32 %v601
        %v696 = vadd.s32 %v692, 3
        %v697 = vand.u32 %v696, 3
        %vm698 = vcmp.lt.s32.totalorder %v697, 2
        %vm699 = vcmp.eq.s32.totalorder %v697, 0
        %v700 = vxor.u32 %v694, 2147483648
        %v701 = vsel %vm699, %v693, %v700
        %vm702 = vcmp.eq.s32.totalorder %v697, 2
        %v703 = vxor.u32 %v693, 2147483648
        %v704 = vsel %vm702, %v703, %v694
        %v705 = vsel %vm698, %v701, %v704
        %v706 = vsel %vm695, nan, %v705
        %v707 = vand.u32 2147483647, %v602
        %vm708 = vcmp.le.f32.partialorder %v707, 0.7853982
        %vm709 = vcmp.lt.s32.totalorder %v602, 0
        %v710 = vand.u32 %v602, 2139095040
        %v711 = vshrl.u32 %v710, 23
        %v712 = vsub.s32 %v711, 127
        %v713 = vand.u32 2147483647, %v602
        %v714 = vand.u32 %v713, 8388607
        %v715 = vor.u32 %v714, 8388608
        %v716 = vsub.s32 0, %v715
        %v717 = vadd.s32 %v712, 1
        %vm718 = vcmp.gt.s32.totalorder %v717, 0
        %v719 = vsel %vm718, %v717, 0
        %v720 = vshrl.u32 %v719, 5
        %v721 = vand.u32 %v719, 31
        %v722 = vsub.s32 32, %v721
        %v723 = vshrl.u32 683565275, %v722
        %v724 = vshll.u32 683565275, %v721
        %v725 = vshrl.u32 2475754826, %v722
        %v726 = vor.u32 %v724, %v725
        %v727 = vshll.u32 2475754826, %v721
        %v728 = vshrl.u32 2131351028, %v722
        %v729 = vor.u32 %v727, %v728
        %v730 = vshll.u32 2131351028, %v721
        %v731 = vshrl.u32 2102212464, %v722
        %v732 = vor.u32 %v730, %v731
        %v733 = vshll.u32 2102212464, %v721
        %v734 = vshrl.u32 920167782, %v722
        %v735 = vor.u32 %v733, %v734
        %v736 = vshll.u32 920167782, %v721
        %v737 = vshrl.u32 1326507024, %v722
        %v738 = vor.u32 %v736, %v737
        %vm739 = vcmp.lt.s32.totalorder %v720, 1
        %vm740 = vcmp.lt.s32.totalorder %v720, 2
        %vm741 = vcmp.lt.s32.totalorder %v720, 3
        %vm742 = vcmp.lt.s32.totalorder %v720, 4
        %v743 = vsel %vm739, %v723, %v726
        %v744 = vsel %vm742, %v732, 2102212464
        %v745 = vsel %vm741, %v729, %v744
        %v746 = vsel %vm740, %v743, %v745
        %v747 = vsel %vm739, %v726, %v729
        %v748 = vsel %vm742, %v735, 920167782
        %v749 = vsel %vm741, %v732, %v748
        %v750 = vsel %vm740, %v747, %v749
        %v751 = vsel %vm739, %v729, %v732
        %v752 = vsel %vm742, %v738, 1326507024
        %v753 = vsel %vm741, %v735, %v752
        %v754 = vsel %vm740, %v751, %v753
        %v755 = vshll.u32 %v715, 8
        %v756 = vmul.u32.u64.compose %v755, %v754
        %v757 = vextract.low.u32 %v756
        %v758 = vextract.high.u32 %v756
        %v759 = vmul.u32.u64.compose %v755, %v750
        %v760 = vextract.low.u32 %v759
        %v761 = vextract.high.u32 %v759
        %v762 = vmul.u32 %v755, %v746
        %v763 = vadd.s32 %v758, %v760
        %vm764 = vc.u32 %v758, %v760
        %v765 = vadd.s32 %v761, 1
        %v766 = vsel %vm764, %v765, %v761
        %v767 = vadd.s32 %v762, %v766
        %v768 = vadd.s32 %v767, 536870912
        %v769 = vshrl.u32 %v768, 30
        %v770 = vshll.u32 %v769, 30
        %v771 = vsub.s32 %v767, %v770
        %vm772 = vcmp.lt.s32.totalorder %v771, 0
        %v773 = vsub.s32 0, %v771
        %v774 = vsel %vm772, %v773, %v771
        %v775 = vclz %v774
        %v776 = vsub.s32 %v775, 2
        %vm777 = vcmp.gt.s32.totalorder 0, %v776
        %v778 = vsel %vm777, 0, %v776
        %v779 = vsub.s32 32, %v778
        %v780 = vshll.u32 %v771, %v778
        %v781 = vshrl.u32 %v763, %v779
        %v782 = vor.u32 %v780, %v781
        %v783 = vsub.s32 4294967266, %v778
        %v784 = vadd.s32 %v783, 127
        %v785 = vshll.u32 %v784, 23
        %v786 = vor.u32 4788187, %v785
        %v787 = vand.u32 2147483647, %v786
        %v789 = vcvt.s32.f32 %v782
        %v790 = vmul.f32 %v789, %v787
        %v791 = vxor.u32 %v790, 2147483648
        %v792 = vsel %vm709, %v791, %v790
        %v793 = vsub.s32 4, %v769
        %v794 = vsel %vm709, %v793, %v769
        %v795 = vsel %vm708, %v602, %v792
        %v796 = vsel %vm708, 0, %v794
        %v797 = vcosq.f32.pop %v795
        %v798 = vsinq.f32.pop %v795
        %vm799 = vweird.f32 %v602
        %v800 = vadd.s32 %v796, 3
        %v801 = vand.u32 %v800, 3
        %vm802 = vcmp.lt.s32.totalorder %v801, 2
        %vm803 = vcmp.eq.s32.totalorder %v801, 0
        %v804 = vxor.u32 %v798, 2147483648
        %v805 = vsel %vm803, %v797, %v804
        %vm806 = vcmp.eq.s32.totalorder %v801, 2
        %v807 = vxor.u32 %v797, 2147483648
        %v808 = vsel %vm806, %v807, %v798
        %v809 = vsel %vm802, %v805, %v808
        %v810 = vsel %vm799, nan, %v809
        %v811 = vmul.f32 %v706, %v593
        %v812 = vmul.f32 %v810, %v594
        %v813 = vmul.f32 %v811, 0.7
        %v814 = vmul.f32 %v812, 0.7
        %v815 = vfloor.f32 %v559
        %v816 = vfloor.f32 %v560
        %v817 = vsub.f32 %v559, %v815
        %v818 = vsub.f32 %v560, %v816
        %v819 = vmul.f32 %v817, 6.2831855
        %v820 = vmul.f32 %v818, 6.2831855
        %v821 = vadd.f32 %v819, %v813
        %v822 = vadd.f32 %v820, %v814
        %v823 = vand.u32 2147483647, %v821
        %vm824 = vcmp.le.f32.partialorder %v823, 0.7853982
        %vm825 = vcmp.lt.s32.totalorder %v821, 0
        %v826 = vand.u32 %v821, 2139095040
        %v827 = vshrl.u32 %v826, 23
        %v828 = vsub.s32 %v827, 127
        %v829 = vand.u32 2147483647, %v821
        %v830 = vand.u32 %v829, 8388607
        %v831 = vor.u32 %v830, 8388608
        %v832 = vsub.s32 0, %v831
        %v833 = vadd.s32 %v828, 1
        %vm834 = vcmp.gt.s32.totalorder %v833, 0
        %v835 = vsel %vm834, %v833, 0
        %v836 = vshrl.u32 %v835, 5
        %v837 = vand.u32 %v835, 31
        %v838 = vsub.s32 32, %v837
        %v839 = vshrl.u32 683565275, %v838
        %v840 = vshll.u32 683565275, %v837
        %v841 = vshrl.u32 2475754826, %v838
        %v842 = vor.u32 %v840, %v841
        %v843 = vshll.u32 2475754826, %v837
        %v844 = vshrl.u32 2131351028, %v838
        %v845 = vor.u32 %v843, %v844
        %v846 = vshll.u32 2131351028, %v837
        %v847 = vshrl.u32 2102212464, %v838
        %v848 = vor.u32 %v846, %v847
        %v849 = vshll.u32 2102212464, %v837
        %v850 = vshrl.u32 920167782, %v838
        %v851 = vor.u32 %v849, %v850
        %v852 = vshll.u32 920167782, %v837
        %v853 = vshrl.u32 1326507024, %v838
        %v854 = vor.u32 %v852, %v853
        %vm855 = vcmp.lt.s32.totalorder %v836, 1
        %vm856 = vcmp.lt.s32.totalorder %v836, 2
        %vm857 = vcmp.lt.s32.totalorder %v836, 3
        %vm858 = vcmp.lt.s32.totalorder %v836, 4
        %v859 = vsel %vm855, %v839, %v842
        %v860 = vsel %vm858, %v848, 2102212464
        %v861 = vsel %vm857, %v845, %v860
        %v862 = vsel %vm856, %v859, %v861
        %v863 = vsel %vm855, %v842, %v845
        %v864 = vsel %vm858, %v851, 920167782
        %v865 = vsel %vm857, %v848, %v864
        %v866 = vsel %vm856, %v863, %v865
        %v867 = vsel %vm855, %v845, %v848
        %v868 = vsel %vm858, %v854, 1326507024
        %v869 = vsel %vm857, %v851, %v868
        %v870 = vsel %vm856, %v867, %v869
        %v871 = vshll.u32 %v831, 8
        %v872 = vmul.u32.u64.compose %v871, %v870
        %v873 = vextract.low.u32 %v872
        %v874 = vextract.high.u32 %v872
        %v875 = vmul.u32.u64.compose %v871, %v866
        %v876 = vextract.low.u32 %v875
        %v877 = vextract.high.u32 %v875
        %v878 = vmul.u32 %v871, %v862
        %v879 = vadd.s32 %v874, %v876
        %vm880 = vc.u32 %v874, %v876
        %v881 = vadd.s32 %v877, 1
        %v882 = vsel %vm880, %v881, %v877
        %v883 = vadd.s32 %v878, %v882
        %v884 = vadd.s32 %v883, 536870912
        %v885 = vshrl.u32 %v884, 30
        %v886 = vshll.u32 %v885, 30
        %v887 = vsub.s32 %v883, %v886
        %vm888 = vcmp.lt.s32.totalorder %v887, 0
        %v889 = vsub.s32 0, %v887
        %v890 = vsel %vm888, %v889, %v887
        %v891 = vclz %v890
        %v892 = vsub.s32 %v891, 2
        %vm893 = vcmp.gt.s32.totalorder 0, %v892
        %v894 = vsel %vm893, 0, %v892
        %v895 = vsub.s32 32, %v894
        %v896 = vshll.u32 %v887, %v894
        %v897 = vshrl.u32 %v879, %v895
        %v898 = vor.u32 %v896, %v897
        %v899 = vsub.s32 4294967266, %v894
        %v900 = vadd.s32 %v899, 127
        %v901 = vshll.u32 %v900, 23
        %v902 = vor.u32 4788187, %v901
        %v903 = vand.u32 2147483647, %v902
        %v905 = vcvt.s32.f32 %v898
        %v906 = vmul.f32 %v905, %v903
        %v907 = vxor.u32 %v906, 2147483648
        %v908 = vsel %vm825, %v907, %v906
        %v909 = vsub.s32 4, %v885
        %v910 = vsel %vm825, %v909, %v885
        %v911 = vsel %vm824, %v821, %v908
        %v912 = vsel %vm824, 0, %v910
        %v913 = vcosq.f32.pop %v911
        %v914 = vsinq.f32.pop %v911
        %vm915 = vweird.f32 %v821
        %v916 = vadd.s32 %v912, 3
        %v917 = vand.u32 %v916, 3
        %vm918 = vcmp.lt.s32.totalorder %v917, 2
        %vm919 = vcmp.eq.s32.totalorder %v917, 0
        %v920 = vxor.u32 %v914, 2147483648
        %v921 = vsel %vm919, %v913, %v920
        %vm922 = vcmp.eq.s32.totalorder %v917, 2
        %v923 = vxor.u32 %v913, 2147483648
        %v924 = vsel %vm922, %v923, %v914
        %v925 = vsel %vm918, %v921, %v924
        %v926 = vsel %vm915, nan, %v925
        %v927 = vand.u32 2147483647, %v822
        %vm928 = vcmp.le.f32.partialorder %v927, 0.7853982
        %vm929 = vcmp.lt.s32.totalorder %v822, 0
        %v930 = vand.u32 %v822, 2139095040
        %v931 = vshrl.u32 %v930, 23
        %v932 = vsub.s32 %v931, 127
        %v933 = vand.u32 2147483647, %v822
        %v934 = vand.u32 %v933, 8388607
        %v935 = vor.u32 %v934, 8388608
        %v936 = vsub.s32 0, %v935
        %v937 = vadd.s32 %v932, 1
        %vm938 = vcmp.gt.s32.totalorder %v937, 0
        %v939 = vsel %vm938, %v937, 0
        %v940 = vshrl.u32 %v939, 5
        %v941 = vand.u32 %v939, 31
        %v942 = vsub.s32 32, %v941
        %v943 = vshrl.u32 683565275, %v942
        %v944 = vshll.u32 683565275, %v941
        %v945 = vshrl.u32 2475754826, %v942
        %v946 = vor.u32 %v944, %v945
        %v947 = vshll.u32 2475754826, %v941
        %v948 = vshrl.u32 2131351028, %v942
        %v949 = vor.u32 %v947, %v948
        %v950 = vshll.u32 2131351028, %v941
        %v951 = vshrl.u32 2102212464, %v942
        %v952 = vor.u32 %v950, %v951
        %v953 = vshll.u32 2102212464, %v941
        %v954 = vshrl.u32 920167782, %v942
        %v955 = vor.u32 %v953, %v954
        %v956 = vshll.u32 920167782, %v941
        %v957 = vshrl.u32 1326507024, %v942
        %v958 = vor.u32 %v956, %v957
        %vm959 = vcmp.lt.s32.totalorder %v940, 1
        %vm960 = vcmp.lt.s32.totalorder %v940, 2
        %vm961 = vcmp.lt.s32.totalorder %v940, 3
        %vm962 = vcmp.lt.s32.totalorder %v940, 4
        %v963 = vsel %vm959, %v943, %v946
        %v964 = vsel %vm962, %v952, 2102212464
        %v965 = vsel %vm961, %v949, %v964
        %v966 = vsel %vm960, %v963, %v965
        %v967 = vsel %vm959, %v946, %v949
        %v968 = vsel %vm962, %v955, 920167782
        %v969 = vsel %vm961, %v952, %v968
        %v970 = vsel %vm960, %v967, %v969
        %v971 = vsel %vm959, %v949, %v952
        %v972 = vsel %vm962, %v958, 1326507024
        %v973 = vsel %vm961, %v955, %v972
        %v974 = vsel %vm960, %v971, %v973
        %v975 = vshll.u32 %v935, 8
        %v976 = vmul.u32.u64.compose %v975, %v974
        %v977 = vextract.low.u32 %v976
        %v978 = vextract.high.u32 %v976
        %v979 = vmul.u32.u64.compose %v975, %v970
        %v980 = vextract.low.u32 %v979
        %v981 = vextract.high.u32 %v979
        %v982 = vmul.u32 %v975, %v966
        %v983 = vadd.s32 %v978, %v980
        %vm984 = vc.u32 %v978, %v980
        %v985 = vadd.s32 %v981, 1
        %v986 = vsel %vm984, %v985, %v981
        %v987 = vadd.s32 %v982, %v986
        %v988 = vadd.s32 %v987, 536870912
        %v989 = vshrl.u32 %v988, 30
        %v990 = vshll.u32 %v989, 30
        %v991 = vsub.s32 %v987, %v990
        %vm992 = vcmp.lt.s32.totalorder %v991, 0
        %v993 = vsub.s32 0, %v991
        %v994 = vsel %vm992, %v993, %v991
        %v995 = vclz %v994
        %v996 = vsub.s32 %v995, 2
        %vm997 = vcmp.gt.s32.totalorder 0, %v996
        %v998 = vsel %vm997, 0, %v996
        %v999 = vsub.s32 32, %v998
        %v1000 = vshll.u32 %v991, %v998
        %v1001 = vshrl.u32 %v983, %v999
        %v1002 = vor.u32 %v1000, %v1001
        %v1003 = vsub.s32 4294967266, %v998
        %v1004 = vadd.s32 %v1003, 127
        %v1005 = vshll.u32 %v1004, 23
        %v1006 = vor.u32 4788187, %v1005
        %v1007 = vand.u32 2147483647, %v1006
        %v1009 = vcvt.s32.f32 %v1002
        %v1010 = vmul.f32 %v1009, %v1007
        %v1011 = vxor.u32 %v1010, 2147483648
        %v1012 = vsel %vm929, %v1011, %v1010
        %v1013 = vsub.s32 4, %v989
        %v1014 = vsel %vm929, %v1013, %v989
        %v1015 = vsel %vm928, %v822, %v1012
        %v1016 = vsel %vm928, 0, %v1014
        %v1017 = vcosq.f32.pop %v1015
        %v1018 = vsinq.f32.pop %v1015
        %vm1019 = vweird.f32 %v822
        %v1020 = vadd.s32 %v1016, 3
        %v1021 = vand.u32 %v1020, 3
        %vm1022 = vcmp.lt.s32.totalorder %v1021, 2
        %vm1023 = vcmp.eq.s32.totalorder %v1021, 0
        %v1024 = vxor.u32 %v1018, 2147483648
        %v1025 = vsel %vm1023, %v1017, %v1024
        %vm1026 = vcmp.eq.s32.totalorder %v1021, 2
        %v1027 = vxor.u32 %v1017, 2147483648
        %v1028 = vsel %vm1026, %v1027, %v1018
        %v1029 = vsel %vm1022, %v1025, %v1028
        %v1030 = vsel %vm1019, nan, %v1029
        %v1031 = vmul.f32 %v926, %v577
        %v1032 = vmul.f32 %v1030, %v578
        %1033 = vst [vmem:[%s273] sm:$0xff] %v1031
        %1034 = vst [vmem:[%s273 + $0x8] sm:$0xff] %v1032
        %s1035 = sand.u32 %s145, 1
        %s1036 = scalar_lea.sflag [#allocation6], %s1035
        %s1037 = sand.u32 %s145, 1
        %s1038 = smul.addr %s1037, 16
        %s1039 = scalar_lea.vmem [#allocation9], %s1038
        // Predicated region
        $region49: #{tpu_custom_call.1} parent=35 // pred_check
          %p1040 = pneg %p155
        $region50: #{tpu_custom_call.1} parent=35 // pred_check_branch
          %1042 = sbr.rel (%p1040) target = $region52
        $region51: #{tpu_custom_call.1} parent=35 // pred_region
          %s1043 = smul.u32 2, %s27
          %s1045 = ssub.s32 256, 256
          %1046 = vsyncadd %s1036, %s1045
          %s1047 = smul.addr %s26, 2
          %s1048 = sadd.s32 %s1043, %s1047
          %s1049 = smul.addr %s1048, 128
          %s1050 = scalar_lea.hbm %s4, %s1049
          %s1052 = sshll.u32 %s1039, 4
          %s1053 = int_to_ptr.vmem [resolvable:$true] %s1052
          %1055 = dma.vmem_to_hbm [thread:$0]  %s1053, 256, %s1050, %s1036
        $region52: #{tpu_custom_call.1} parent=35 // pred_fallthru
          _
      $region36: #{tpu_custom_call.1} parent=5 // pred_fallthru
        _
      %p1056 = scmp.le.s32.totalorder 2, %s17
      // Predicated region
      $region53: #{tpu_custom_call.1} parent=5 // pred_check
        %p1057 = pneg %p1056
      $region54: #{tpu_custom_call.1} parent=5 // pred_check_branch
        %1059 = sbr.rel (%p1057) target = $region56
      $region55: #{tpu_custom_call.1} parent=5 // pred_region
        %s1060 = ssub.s32 %s17, 2
        // Predicated region
        $region57: #{tpu_custom_call.1} parent=55 // pred_check
          %p1061 = pneg %p161
        $region58: #{tpu_custom_call.1} parent=55 // pred_check_branch
          %1063 = sbr.rel (%p1061) target = $region60
        $region59: #{tpu_custom_call.1} parent=55 // pred_region
          %s1064 = sand.u32 %s146, 1
          %s1065 = scalar_lea.sflag [#allocation6], %s1064
          %s1066 = sand.u32 %s146, 1
          %s1067 = smul.addr %s1066, 16
          %s1068 = scalar_lea.vmem [#allocation9], %s1067
          %1069 = dma.done %s1065, 256
        $region60: #{tpu_custom_call.1} parent=55 // pred_fallthru
          _
      $region56: #{tpu_custom_call.1} parent=5 // pred_fallthru
        _
    $region6: #{tpu_custom_call.1} parent=1 // loop_footer
      %s21 = sadd.s32 1, %s17
    $region7: #{tpu_custom_call.1} parent=1 // loop_footer_branch
      %16 = sbr.rel target = $region3
    $region8: #{tpu_custom_call.1} parent=1 // loop_exit
      _
    %1070 = vsyncpa [#allocation5], 1
    %s1071 = scalar_lea.sflag [#allocation5], 1
    %1072 = vsyncpa %s1071, 1
    %1073 = vsyncpa [#allocation8], 1
    %1074 = vsyncpa [#allocation6], 1
    %s1075 = scalar_lea.sflag [#allocation6], 1
    %1076 = vsyncpa %s1075, 1

</llo_original>
